<compile_context>
chip_gen: v7x
topology: tpu7x:2x2x1
jax: 0.10.0
libtpu: 0.0.40
codegen_flags: <defaults>
</compile_context>

<pallas_src>
import functools
import numpy as np
import jax
import jax.numpy as jnp
from jax.experimental import pallas as pl
from jax.experimental.pallas import tpu as pltpu

# ---------------- configuration (small shapes consistent with the module) ------
WORD_EMB_DIM = 32            # module default 256, shrunk for a small example
D3 = WORD_EMB_DIM * 3        # mention scorer input dim (96)
D9 = WORD_EMB_DIM * 9        # pairwise scorer input dim (288)
HIDDEN = 64                  # FFNNScore hidden width
P_LAMBDA = 0.4
K = 4                        # module default 250, shrunk
T_TOKENS = 12
MAX_WIDTH = 3

LANE = 128                   # TPU lane width
D_PAD = 128                  # D3 (96) padded to a lane multiple
H_PAD = 128                  # HIDDEN (64) padded to a lane multiple
OUT_PAD = 128                # lane-dense antecedent output width (>= K+1)
TM_MENTION = 32              # mention-kernel row tile (use 256-512 at production m)
NA_TILE = 64                 # anchor rows per antecedent grid step (review: 64-128;
                             # at production sizes keep na_pad // NA_TILE >= 2 so the
                             # v7x grid still shards across its two TensorCores)
K_EXT = ((K + 7) // 8) * 8   # K rounded up to a sublane multiple
EXT_ROWS = NA_TILE + K_EXT   # anchor tile + candidate window

assert K + 1 <= OUT_PAD

_VMEM = pl.BlockSpec(memory_space=pltpu.MemorySpace.VMEM)
_SMEM = pl.BlockSpec(memory_space=pltpu.MemorySpace.SMEM)


def _round_up(x, m):
    return ((x + m - 1) // m) * m


def _pad2(a, rows, cols):
    out = jnp.zeros((rows, cols), jnp.float32)
    return out.at[:a.shape[0], :a.shape[1]].set(a.astype(jnp.float32))


# ----------------------------- Pallas kernels ----------------------------------
def _mention_kernel(x_ref, w1_ref, b1_ref, w2row_ref, b2_ref, out_ref):
    """FFNNScore over one tile of span vectors; emits 'vectors_with_scores'.

    The output tile is the input tile with lane D3 overwritten by the mention
    score, so the store is lane-dense AND carries useful data (the second stage
    gathers its selected rows straight from it).  The second FFNN layer is a VPU
    multiply + XLU lane reduce instead of a (128x128) MXU matmul with one useful
    column.
    """
    x = x_ref[...]
    h = jnp.maximum(
        jnp.dot(x, w1_ref[...], preferred_element_type=jnp.float32) + b1_ref[...],
        0.0)
    score = jnp.sum(h * w2row_ref[...], axis=-1, keepdims=True) + b2_ref[0, 0]
    lane = jax.lax.broadcasted_iota(jnp.int32, x.shape, 1)
    out_ref[...] = jnp.where(lane == D3, score, x)


def mention_vws_pallas(x, w1, b1, w2row, b2):
    m_pad = x.shape[0]
    const = lambda shape: pl.BlockSpec(shape, lambda i: (0, 0))
    return pl.pallas_call(
        _mention_kernel,
        out_shape=jax.ShapeDtypeStruct((m_pad, D_PAD), jnp.float32),
        grid=(m_pad // TM_MENTION,),
        in_specs=[
            pl.BlockSpec((TM_MENTION, D_PAD), lambda i: (i, 0)),   # span vectors tile
            const((D_PAD, H_PAD)),                                 # W1
            const((1, H_PAD)),                                     # b1
            const((1, H_PAD)),                                     # w2 as a row
            _SMEM,                                                 # b2 scalar
        ],
        out_specs=pl.BlockSpec((TM_MENTION, D_PAD), lambda i: (i, 0)),
        compiler_params=pltpu.CompilerParams(
            dimension_semantics=("parallel",),
            vmem_limit_bytes=32 * 1024 * 1024),
    )(x, w1, b1, w2row, b2)


def _pair_proj_kernel(vws_ref, w1ac_ref, b1ac_ref, out_ref):
    """Anchor & candidate first-layer projections for ALL selected spans, once.

    W1a and W1c are stacked along the output lanes so both projections come out
    of a single MXU matmul:
        out[:, :H_PAD]        = vws @ W1a + b1      (anchor part, b1 folded in)
        out[:, H_PAD:2*H_PAD] = vws @ W1c           (candidate part)
    This removes the ~K-fold recompute of the candidate projection per anchor
    tile flagged in the review.
    """
    out_ref[...] = (
        jnp.dot(vws_ref[...], w1ac_ref[...], preferred_element_type=jnp.float32)
        + b1ac_ref[...])


def pair_proj_pallas(vws_pad, w1ac, b1ac):
    n_pad = vws_pad.shape[0]
    return pl.pallas_call(
        _pair_proj_kernel,
        out_shape=jax.ShapeDtypeStruct((n_pad, 2 * H_PAD), jnp.float32),
        in_specs=[_VMEM, _VMEM, _VMEM],
        out_specs=_VMEM,
        compiler_params=pltpu.CompilerParams(vmem_limit_bytes=32 * 1024 * 1024),
    )(vws_pad, w1ac, b1ac)


def _antecedent_kernel(vecs_ref, proj_ref, w1x_ref, w2row_ref, b2_ref, out_ref, *,
                       n_anchor, k, d3, na_tile, ext_rows, h_pad):
    """Antecedent softmax for one tile of `na_tile` anchor rows.

    vecs_ref : (n_pad, 128) "vectors_with_scores" (lane d3 = mention score).
    proj_ref : (n_pad, 256) precomputed first-layer projections
               (lanes [0,128) anchor part with b1 folded, lanes [128,256) cand part).
    Only the cross-term projection (anchor*cand) @ W1x is computed here, batched
    over all K offsets into a single (k*na_tile, 128) @ (128, 128) MXU matmul.
    out_ref : (na_tile, 128) lane-dense tile; cols 0..k-1 = antecedent probs,
              col k = dummy, rest zero.
    """
    row_start = pl.multiple_of(pl.program_id(0) * na_tile, na_tile)

    vext = vecs_ref[pl.ds(row_start, ext_rows), :]             # (ext_rows, 128)
    anchors = vext[:na_tile, :]                                 # (na_tile, 128)
    a_sc = anchors[:, d3:d3 + 1]                                # anchor mention score

    h_anchor = proj_ref[pl.ds(row_start, na_tile), pl.ds(0, h_pad)]
    hc_ext = proj_ref[pl.ds(row_start, ext_rows), pl.ds(h_pad, h_pad)]

    # Batched cross-term: stack the K shifted candidate windows along the sublane
    # axis (cheap slices + VPU multiplies), then ONE MXU matmul for all offsets.
    # TODO(synk): at production K=250 build the stacks with a fori_loop/gather
    # instead of a static Python slice loop.
    cross_stack = jnp.concatenate(
        [anchors * vext[d:d + na_tile, :] for d in range(1, k + 1)], axis=0)
    hc_stack = jnp.concatenate(
        [hc_ext[d:d + na_tile, :] for d in range(1, k + 1)], axis=0)
    ha_stack = jnp.concatenate([h_anchor] * k, axis=0)

    h = jnp.maximum(
        ha_stack + hc_stack
        + jnp.dot(cross_stack, w1x_ref[...], preferred_element_type=jnp.float32),
        0.0)                                                    # (k*na_tile, H_PAD)
    # second FFNN layer: VPU multiply + XLU lane reduce (no (H,1) MXU matmuls)
    pw = jnp.sum(h * w2row_ref[...], axis=-1, keepdims=True)    # (k*na_tile, 1)

    # Reassemble (na_tile, k).  TODO(synk): at production k=250 replace this short
    # placement loop with a single XLU transpose of the (k, na_tile) block.
    cols = [pw[(d - 1) * na_tile:d * na_tile, :] + vext[d:d + na_tile, d3:d3 + 1]
            for d in range(1, k + 1)]
    scores_k = jnp.concatenate(cols, axis=1) + a_sc + b2_ref[0, 0]   # (na_tile, k)

    out_pad = out_ref.shape[1]
    scores_full = jnp.concatenate(
        [scores_k, jnp.zeros((na_tile, out_pad - k), jnp.float32)], axis=1)

    col = jax.lax.broadcasted_iota(jnp.int32, (na_tile, out_pad), 1)
    grow = row_start + jax.lax.broadcasted_iota(jnp.int32, (na_tile, out_pad), 0)
    # slot j valid iff j < min(k, n_anchor - i); dummy column k always valid
    valid = (col == k) | (col < jnp.minimum(k, n_anchor - grow))
    masked = jnp.where(valid, scores_full, -1e30)
    m_row = jnp.max(masked, axis=1, keepdims=True)
    e = jnp.where(valid, jnp.exp(masked - m_row), 0.0)
    # EXACT normalization (the approx EUP reciprocal previously left probs ~0.3% low)
    out_ref[...] = e / jnp.sum(e, axis=1, keepdims=True)


def antecedent_probs_pallas(vecs_pad, proj, w1x, w2row, b2, n_anchor, na_pad):
    n_pad, d_pad = vecs_pad.shape
    kernel = functools.partial(_antecedent_kernel, n_anchor=n_anchor, k=K, d3=D3,
                               na_tile=NA_TILE, ext_rows=EXT_ROWS, h_pad=H_PAD)
    const = lambda shape: pl.BlockSpec(shape, lambda i: (0, 0))
    # Note: the invariant (const) blocks are small here; at production sizes on
    # v7x (64 MiB VMEM) consider pipeline_mode=pl.Buffered(1) for them.
    return pl.pallas_call(
        kernel,
        out_shape=jax.ShapeDtypeStruct((na_pad, OUT_PAD), jnp.float32),
        grid=(na_pad // NA_TILE,),
        in_specs=[
            const((n_pad, d_pad)),           # vectors_with_scores (resident)
            const((n_pad, 2 * H_PAD)),       # precomputed anchor/candidate projections
            const((d_pad, H_PAD)),           # W1 cross block
            const((1, H_PAD)),               # w2 as a row
            _SMEM,                           # b2 scalar
        ],
        out_specs=pl.BlockSpec((NA_TILE, OUT_PAD), lambda i: (i, 0)),
        compiler_params=pltpu.CompilerParams(
            dimension_semantics=("parallel",),
            vmem_limit_bytes=32 * 1024 * 1024),
    )(vecs_pad, proj, w1x, w2row, b2)


# ----------------------------- plain-JAX glue ----------------------------------
def span_embedder(doc):
    """Synthetic span embedder: [emb[start], emb[end], mean(emb[start:end+1])]."""
    t_tok = doc.shape[0]
    starts, ends, vecs = [], [], []
    for s in range(t_tok):
        for w in range(MAX_WIDTH):
            e = s + w
            if e < t_tok:
                starts.append(s)
                ends.append(e)
                vecs.append(jnp.concatenate(
                    [doc[s], doc[e], jnp.mean(doc[s:e + 1], axis=0)]))
    vectors = jnp.stack(vecs).astype(jnp.float32)                # (num_spans, D3)
    return (jnp.asarray(starts, jnp.int32), jnp.asarray(ends, jnp.int32),
            vectors, len(starts))


def coreference_forward(doc, params):
    starts, ends, vectors, t = span_embedder(doc)
    m = vectors.shape[0]
    m_pad = _round_up(m, TM_MENTION)

    # lane/sublane-padded span vectors (features 96 -> 128, rows -> tile multiple)
    x = jnp.zeros((m_pad, D_PAD), jnp.float32).at[:m, :D3].set(vectors)

    # --- mention scoring (Pallas): emits vectors_with_scores, score at lane D3 ---
    vws_all = mention_vws_pallas(x, params["w1m_p"], params["b1m_p"],
                                 params["w2m_row"], params["b2m_s"])   # (m_pad, 128)
    ment_scores = vws_all[:, D3]
    scores_all = jnp.where(jnp.arange(m_pad) < m, ment_scores, -jnp.inf)

    # --- on-device top-k + (start, end) descending sort (no host round-trip) ---
    num_keep = max(1, min(int(P_LAMBDA * t), m))     # clamp to real span count
    _, top_idx = jax.lax.top_k(scores_all, num_keep)
    sel_starts = starts[top_idx]
    sel_ends = ends[top_idx]
    order = jnp.argsort(-(sel_starts * (T_TOKENS + 1) + sel_ends))
    sel_idx = top_idx[order]

    sel_vws = vws_all[sel_idx]                       # (n, 128) span vector + score
    sel_scores = sel_vws[:, D3]
    spans = (sel_starts[order], sel_ends[order])

    n = num_keep
    na = n - 1
    na_pad = _round_up(max(na, 1), NA_TILE)
    n_pad = na_pad + K_EXT                           # keeps all window slices in bounds
    vecs_pad = jnp.zeros((n_pad, D_PAD), jnp.float32).at[:n].set(sel_vws)

    # --- anchor/candidate first-layer projections precomputed once (1x, not ~Kx) ---
    proj = pair_proj_pallas(vecs_pad, params["w1p_ac"], params["b1p_ac"])

    probs_full = antecedent_probs_pallas(
        vecs_pad, proj, params["w1p_x"], params["w2p_row"], params["b2p_s"],
        na, na_pad)
    probs = probs_full[:na, :K + 1]                  # trim lane/row padding
    return spans, probs, (sel_vws[:, :D3], sel_scores, n, ment_scores[:m])


# ----------------------------- reference (pure JAX) -----------------------------
def _ffnn_ref(x, w1, b1, w2, b2):
    h = jnp.maximum(x @ w1 + b1, 0.0)
    return h @ w2 + b2


def reference_antecedents(sel_vecs, sel_scores, params):
    n = sel_vecs.shape[0]
    vws = jnp.concatenate([sel_vecs, sel_scores[:, None]], axis=1)
    out = []
    for i in range(n - 1):
        sc = min(K, n - i - 1)
        a = vws[i, :-1]
        cands = vws[i + 1:i + sc + 1, :-1]
        a_rep = jnp.broadcast_to(a, (sc, a.shape[0]))
        pair = jnp.concatenate([a_rep, cands, a_rep * cands], axis=1)
        pw = _ffnn_ref(pair, params["w1p"], params["b1p"],
                       params["w2p"], params["b2p"])[:, 0]
        scores = jnp.concatenate(
            [pw + vws[i + 1:i + sc + 1, -1] + vws[i, -1],
             jnp.zeros((1,), jnp.float32)])
        out.append(jax.nn.softmax(scores))
    return out


# ----------------------------- parameter init -----------------------------------
def init_params(key):
    ks = jax.random.split(key, 8)

    def lin(k, fan_in, fan_out):
        return (jax.random.normal(k, (fan_in, fan_out), jnp.float32)
                / np.sqrt(fan_in)).astype(jnp.float32)

    w1m = lin(ks[0], D3, HIDDEN)
    b1m = 0.1 * jax.random.normal(ks[1], (1, HIDDEN), jnp.float32)
    w2m = lin(ks[2], HIDDEN, 1)
    b2m = 0.1 * jax.random.normal(ks[3], (1, 1), jnp.float32)
    w1p = lin(ks[4], D9, HIDDEN)
    b1p = 0.1 * jax.random.normal(ks[5], (1, HIDDEN), jnp.float32)
    w2p = lin(ks[6], HIDDEN, 1)
    b2p = 0.1 * jax.random.normal(ks[7], (1, 1), jnp.float32)

    params = dict(w1m=w1m, b1m=b1m, w2m=w2m, b2m=b2m,
                  w1p=w1p, b1p=b1p, w2p=w2p, b2p=b2p)

    # MXU-aligned / lane-dense layouts used by the kernels.
    # TODO(synk): consider bf16 operands (keep f32 accumulation) at production sizes.
    w1p_a = _pad2(w1p[:D3], D_PAD, H_PAD)            # anchor block of pairwise W1
    w1p_c = _pad2(w1p[D3:2 * D3], D_PAD, H_PAD)      # candidate block
    params.update(
        w1m_p=_pad2(w1m, D_PAD, H_PAD),
        b1m_p=_pad2(b1m, 1, H_PAD),
        w2m_row=_pad2(w2m.T, 1, H_PAD),
        b2m_s=b2m.astype(jnp.float32),               # SMEM scalar
        # anchor & candidate blocks stacked along output lanes -> one matmul
        w1p_ac=jnp.concatenate([w1p_a, w1p_c], axis=1),           # (128, 256)
        b1p_ac=jnp.concatenate([_pad2(b1p, 1, H_PAD),
                                jnp.zeros((1, H_PAD), jnp.float32)], axis=1),
        w1p_x=_pad2(w1p[2 * D3:], D_PAD, H_PAD),
        w2p_row=_pad2(w2p.T, 1, H_PAD),
        b2p_s=b2p.astype(jnp.float32),               # SMEM scalar
    )
    return params


if __name__ == "__main__":
    key = jax.random.PRNGKey(0)
    k_doc, k_par = jax.random.split(key)
    doc = jax.random.normal(k_doc, (T_TOKENS, WORD_EMB_DIM), jnp.float32)
    params = init_params(k_par)

    spans, probs, (sel_vecs, sel_scores, n, ment_scores) = coreference_forward(doc, params)
    probs = jax.block_until_ready(probs)

    # --- check mention scorer against a pure-JAX FFNN ---
    _, _, vectors, _ = span_embedder(doc)
    ref_m = _ffnn_ref(vectors, params["w1m"], params["b1m"],
                      params["w2m"], params["b2m"])[:, 0]
    np.testing.assert_allclose(np.asarray(ment_scores), np.asarray(ref_m),
                               rtol=2e-3, atol=1e-4)

    # --- check antecedent distributions against a pure-JAX transcription of the
    # torch forward ---
    ref = reference_antecedents(sel_vecs, sel_scores, params)
    for i, r in enumerate(ref):
        sc = min(K, n - i - 1)
        got = jnp.concatenate([probs[i, :sc], probs[i, K:K + 1]])
        np.testing.assert_allclose(np.asarray(got), np.asarray(r),
                                   rtol=2e-3, atol=1e-4)

    print("KERNEL_OK")
</pallas_src>

<mosaic_0001>
module attributes {stable_mosaic.version = 11 : i64} {
  func.func @_mention_kernel(%arg0: i32, %arg1: memref<32x128xf32, #tpu.memory_space<vmem>>, %arg2: memref<128x128xf32, #tpu.memory_space<vmem>>, %arg3: memref<1x128xf32, #tpu.memory_space<vmem>>, %arg4: memref<1x128xf32, #tpu.memory_space<vmem>>, %arg5: memref<1x1xf32, #tpu.memory_space<smem>>, %arg6: memref<32x128xf32, #tpu.memory_space<vmem>>) attributes {dimension_semantics = [#tpu.dimension_semantics<parallel>], iteration_bounds = array<i64: 2>, scalar_prefetch = 0 : i64, scratch_operands = 0 : i64, tpu.core_type = #tpu.core_type<tc>, window_params = [{transform_indices = @transform_0, window_bounds = array<i64: 32, 128>}, {pipeline_mode = #tpu.pipeline_mode<synchronous>, transform_indices = @transform_1, window_bounds = array<i64: 128, 128>}, {pipeline_mode = #tpu.pipeline_mode<synchronous>, transform_indices = @transform_2, window_bounds = array<i64: 1, 128>}, {pipeline_mode = #tpu.pipeline_mode<synchronous>, transform_indices = @transform_3, window_bounds = array<i64: 1, 128>}, {transform_indices = @transform_4, window_bounds = array<i64: 1, 1>}, {transform_indices = @transform_5, window_bounds = array<i64: 32, 128>}]} {
    %c0 = arith.constant 0 : index
    %c0_0 = arith.constant 0 : index
    %0 = vector.load %arg1[%c0, %c0_0] : memref<32x128xf32, #tpu.memory_space<vmem>>, vector<32x128xf32>
    %c0_1 = arith.constant 0 : index
    %c0_2 = arith.constant 0 : index
    %1 = vector.load %arg2[%c0_1, %c0_2] : memref<128x128xf32, #tpu.memory_space<vmem>>, vector<128x128xf32>
    %cst = arith.constant dense<0.000000e+00> : vector<32x128xf32>
    %2 = tpu.matmul %0, %1, %cst {dimension_numbers = #tpu.dot_dimension_numbers<[1], [0], [0], [1], [0, 0, 1, 1], [], []>} : vector<32x128xf32>, vector<128x128xf32>, vector<32x128xf32> -> vector<32x128xf32>
    %c0_3 = arith.constant 0 : index
    %c0_4 = arith.constant 0 : index
    %3 = vector.load %arg3[%c0_3, %c0_4] : memref<1x128xf32, #tpu.memory_space<vmem>>, vector<1x128xf32>
    %4 = vector.broadcast %3 : vector<1x128xf32> to vector<32x128xf32>
    %5 = arith.addf %2, %4 : vector<32x128xf32>
    %cst_5 = arith.constant 0.000000e+00 : f32
    %6 = vector.broadcast %cst_5 : f32 to vector<32x128xf32>
    %7 = arith.maximumf %5, %6 : vector<32x128xf32>
    %c0_6 = arith.constant 0 : index
    %c0_7 = arith.constant 0 : index
    %8 = vector.load %arg4[%c0_6, %c0_7] : memref<1x128xf32, #tpu.memory_space<vmem>>, vector<1x128xf32>
    %9 = vector.broadcast %8 : vector<1x128xf32> to vector<32x128xf32>
    %10 = arith.mulf %7, %9 : vector<32x128xf32>
    %cst_8 = arith.constant dense<0.000000e+00> : vector<32xf32>
    %11 = vector.multi_reduction <add>, %10, %cst_8 [1] : vector<32x128xf32> to vector<32xf32>
    %12 = vector.shape_cast %11 : vector<32xf32> to vector<32x1xf32>
    %c0_9 = arith.constant 0 : index
    %c0_10 = arith.constant 0 : index
    %13 = memref.load %arg5[%c0_9, %c0_10] : memref<1x1xf32, #tpu.memory_space<smem>>
    %14 = vector.broadcast %13 : f32 to vector<32x1xf32>
    %15 = arith.addf %12, %14 : vector<32x1xf32>
    %16 = tpu.iota {dimensions = array<i32: 1>} : vector<32x128xi32>
    %c96_i32 = arith.constant 96 : i32
    %17 = vector.broadcast %c96_i32 : i32 to vector<32x128xi32>
    %18 = arith.cmpi eq, %16, %17 : vector<32x128xi32>
    %19 = vector.shape_cast %15 : vector<32x1xf32> to vector<32x1xf32>
    %20 = vector.broadcast %19 : vector<32x1xf32> to vector<32x128xf32>
    %21 = arith.select %18, %20, %0 : vector<32x128xi1>, vector<32x128xf32>
    %c0_11 = arith.constant 0 : index
    %c0_12 = arith.constant 0 : index
    %22 = vector.load %arg6[%c0_11, %c0_12] : memref<32x128xf32, #tpu.memory_space<vmem>>, vector<32x128xf32>
    tpu.vector_store %arg6[%c0_11, %c0_12], %21 {strides = array<i32>} : memref<32x128xf32, #tpu.memory_space<vmem>>, vector<32x128xf32>,
    return
  }
  func.func @transform_0(%arg0: i32) -> (i32, i32) {
    %c0_i32 = arith.constant 0 : i32
    %c0_i32_0 = arith.constant 0 : i32
    return %arg0, %c0_i32 : i32, i32
  }
  func.func @transform_1(%arg0: i32) -> (i32, i32) {
    %c0_i32 = arith.constant 0 : i32
    %c0_i32_0 = arith.constant 0 : i32
    %c0_i32_1 = arith.constant 0 : i32
    return %c0_i32, %c0_i32_0 : i32, i32
  }
  func.func @transform_2(%arg0: i32) -> (i32, i32) {
    %c0_i32 = arith.constant 0 : i32
    %c0_i32_0 = arith.constant 0 : i32
    %c0_i32_1 = arith.constant 0 : i32
    return %c0_i32, %c0_i32_0 : i32, i32
  }
  func.func @transform_3(%arg0: i32) -> (i32, i32) {
    %c0_i32 = arith.constant 0 : i32
    %c0_i32_0 = arith.constant 0 : i32
    %c0_i32_1 = arith.constant 0 : i32
    return %c0_i32, %c0_i32_0 : i32, i32
  }
  func.func @transform_4(%arg0: i32) -> (i32, i32) {
    %c0_i32 = arith.constant 0 : i32
    %c0_i32_0 = arith.constant 0 : i32
    %c0_i32_1 = arith.constant 0 : i32
    return %c0_i32, %c0_i32_0 : i32, i32
  }
  func.func @transform_5(%arg0: i32) -> (i32, i32) {
    %c0_i32 = arith.constant 0 : i32
    %c0_i32_0 = arith.constant 0 : i32
    return %arg0, %c0_i32 : i32, i32
  }
}

</mosaic_0001>

<llo_original>
// kernel: tpu_custom_call.1
$region0: #{tpu_custom_call.1}
  #allocation0 [shape = 'u32[]', space=smem, size = 0x4, offset = 0x4, fixed_abs, tag = 'smem constant byte address 0x4 - core index']
  #allocation1 [shape = 'u32[144,128]{1,0:T(1,128)}', space=vmem, size = 0x12000, scoped, tag = 'internal scratch']
  #allocation2 [shape = 'f32[1,1]{1,0:T(1,128)S(6)}', space=smem, size = 0x200, scoped, tag = 'scoped memory for tpu_custom_call.1']
  %s0 = inlined_call_operand.hbm [shape: f32[64,128], index: 0, kind: input, shape index: {}]
  %s1 = inlined_call_operand.hbm [shape: f32[128,128], index: 1, kind: input, shape index: {}]
  %s2 = inlined_call_operand.vmem [shape: f32[1,128], index: 2, kind: input, shape index: {}]
  %s3 = inlined_call_operand.vmem [shape: f32[1,128], index: 3, kind: input, shape index: {}]
  %s4 = inlined_call_operand.<no memory space> [shape: f32[1,1], index: 4, kind: input, shape index: {}]
  %s5 = inlined_call_operand.hbm [shape: f32[64,128], index: 5, kind: output, shape index: {}]
  %s6 = sld [smem:[#allocation0]]
  $region61: #{tpu_custom_call.1} parent=0
    _
  %s8 = ssub.s32 1, %s6
  %s9 = scalar_select 0, %s8, %s6
  %10 = sst [smem:[#allocation2]] %s4
  $region1: #{tpu_custom_call.1} parent=0
    #allocation3 [shape = 'u8[32768]{0}', space=vmem, size = 0x8000, scoped, tag = 'input window, operand 0']
    #allocation4 [shape = 's32[2]{0}', space=sflag, size = 0x8, scoped, tag = 'scoped memory for tpu_custom_call.1']
    #allocation5 [shape = 's32[2]{0}', space=sflag, size = 0x8, scoped, tag = 'scoped memory for tpu_custom_call.1']
    #allocation6 [shape = 'u8[65536]{0}', space=vmem, size = 0x10000, scoped, tag = 'input window, operand 1, single buffered']
    #allocation7 [shape = 's32[1]{0}', space=sflag, size = 0x4, scoped, tag = 'scoped memory for tpu_custom_call.1']
    #allocation8 [shape = 'u8[32768]{0}', space=vmem, size = 0x8000, scoped, tag = 'output window, operand 0']
    %11 = vsyncpa [#allocation4], 0
    %s12 = scalar_lea.sflag [#allocation4], 1
    %13 = vsyncpa %s12, 0
    %14 = vsyncpa [#allocation7], 0
    %15 = vsyncpa [#allocation5], 0
    %s16 = scalar_lea.sflag [#allocation5], 1
    %17 = vsyncpa %s16, 0
    loop: start=0, step=1, limit=4
    $region2: #{tpu_custom_call.1} parent=1 // loop_pre_header
      _
    $region3: #{tpu_custom_call.1} parent=1 // loop_header
      %s19 = sphi 0, %s23
      %p20 = scmp.ge.s32.totalorder %s19, 4
      %s29 = sphi 0, %s31
      %s32 = sphi 0, %s29
      %s33 = sphi 0, %s32
      %s49 = sphi 0, %s33
      %s53 = sphi 0, %s53
      %s55 = sphi 0, %s53
      %s56 = sphi 0, %s55
      %s70 = sphi 0, %s56
      %s74 = sphi 0, %s74
      %s76 = sphi 0, %s74
      %s77 = sphi 0, %s76
      %s91 = sphi 0, %s77
      %s95 = sphi 0, %s95
      %s97 = sphi 0, %s95
      %s98 = sphi 0, %s97
      %s112 = sphi 0, %s98
      %s116 = sphi 0, %s116
      %s118 = sphi 0, %s116
      %s119 = sphi 0, %s118
      %s133 = sphi 0, %s119
      %s139 = sphi 0, %s141
      %s142 = sphi 0, %s139
      %s143 = sphi 0, %s142
      %s159 = sphi 0, %s143
    $region4: #{tpu_custom_call.1} parent=1 // loop_header_branch
      %22 = sbr.rel (%p20) target = $region8
    $region5: #{tpu_custom_call.1} parent=1 // loop_body
      %s24 = ssub.s32 %s19, 1
      %s25 = ssub.s32 %s19, 2
      %s26 = sadd.s32 %s19, 1
      %s27 = ssub.s32 %s19, %s26
      %p28 = scmp.eq.s32.totalorder %s27, 0
      %s30 = sadd.s32 %s29, 1
      %s31 = scalar_select %p28, %s29, %s30
      %p34 = pneg %p28
      %p35 = scmp.eq.s32.totalorder %s19, 1
      %p36 = por %p34, %p35
      %p37 = scmp.ne.s32.totalorder %s29, %s32
      %p38 = scmp.eq.s32.totalorder %s19, 0
      %p39 = por %p37, %p38
      %p40 = scmp.ne.s32.totalorder %s29, %s32
      %p41 = scmp.eq.s32.totalorder %s24, 1
      %p42 = por %p40, %p41
      %p43 = scmp.ne.s32.totalorder %s32, %s33
      %p44 = scmp.eq.s32.totalorder %s24, 0
      %p45 = por %p43, %p44
      %p46 = scmp.ne.s32.totalorder %s32, %s33
      %p47 = scmp.eq.s32.totalorder %s25, 1
      %p48 = por %p46, %p47
      %p50 = scmp.ne.s32.totalorder %s33, %s49
      %p51 = scmp.eq.s32.totalorder %s25, 0
      %p52 = por %p50, %p51
      %s54 = sadd.s32 %s53, 1
      %p57 = scmp.eq.s32.totalorder %s19, 1
      %p58 = scmp.ne.s32.totalorder %s53, %s55
      %p59 = scmp.eq.s32.totalorder %s19, 0
      %p60 = por %p58, %p59
      %p61 = scmp.ne.s32.totalorder %s53, %s55
      %p62 = scmp.eq.s32.totalorder %s24, 1
      %p63 = por %p61, %p62
      %p64 = scmp.ne.s32.totalorder %s55, %s56
      %p65 = scmp.eq.s32.totalorder %s24, 0
      %p66 = por %p64, %p65
      %p67 = scmp.ne.s32.totalorder %s55, %s56
      %p68 = scmp.eq.s32.totalorder %s25, 1
      %p69 = por %p67, %p68
      %p71 = scmp.ne.s32.totalorder %s56, %s70
      %p72 = scmp.eq.s32.totalorder %s25, 0
      %p73 = por %p71, %p72
      %s75 = sadd.s32 %s74, 1
      %p78 = scmp.eq.s32.totalorder %s19, 1
      %p79 = scmp.ne.s32.totalorder %s74, %s76
      %p80 = scmp.eq.s32.totalorder %s19, 0
      %p81 = por %p79, %p80
      %p82 = scmp.ne.s32.totalorder %s74, %s76
      %p83 = scmp.eq.s32.totalorder %s24, 1
      %p84 = por %p82, %p83
      %p85 = scmp.ne.s32.totalorder %s76, %s77
      %p86 = scmp.eq.s32.totalorder %s24, 0
      %p87 = por %p85, %p86
      %p88 = scmp.ne.s32.totalorder %s76, %s77
      %p89 = scmp.eq.s32.totalorder %s25, 1
      %p90 = por %p88, %p89
      %p92 = scmp.ne.s32.totalorder %s77, %s91
      %p93 = scmp.eq.s32.totalorder %s25, 0
      %p94 = por %p92, %p93
      %s96 = sadd.s32 %s95, 1
      %p99 = scmp.eq.s32.totalorder %s19, 1
      %p100 = scmp.ne.s32.totalorder %s95, %s97
      %p101 = scmp.eq.s32.totalorder %s19, 0
      %p102 = por %p100, %p101
      %p103 = scmp.ne.s32.totalorder %s95, %s97
      %p104 = scmp.eq.s32.totalorder %s24, 1
      %p105 = por %p103, %p104
      %p106 = scmp.ne.s32.totalorder %s97, %s98
      %p107 = scmp.eq.s32.totalorder %s24, 0
      %p108 = por %p106, %p107
      %p109 = scmp.ne.s32.totalorder %s97, %s98
      %p110 = scmp.eq.s32.totalorder %s25, 1
      %p111 = por %p109, %p110
      %p113 = scmp.ne.s32.totalorder %s98, %s112
      %p114 = scmp.eq.s32.totalorder %s25, 0
      %p115 = por %p113, %p114
      %s117 = sadd.s32 %s116, 1
      %p120 = scmp.eq.s32.totalorder %s19, 1
      %p121 = scmp.ne.s32.totalorder %s116, %s118
      %p122 = scmp.eq.s32.totalorder %s19, 0
      %p123 = por %p121, %p122
      %p124 = scmp.ne.s32.totalorder %s116, %s118
      %p125 = scmp.eq.s32.totalorder %s24, 1
      %p126 = por %p124, %p125
      %p127 = scmp.ne.s32.totalorder %s118, %s119
      %p128 = scmp.eq.s32.totalorder %s24, 0
      %p129 = por %p127, %p128
      %p130 = scmp.ne.s32.totalorder %s118, %s119
      %p131 = scmp.eq.s32.totalorder %s25, 1
      %p132 = por %p130, %p131
      %p134 = scmp.ne.s32.totalorder %s119, %s133
      %p135 = scmp.eq.s32.totalorder %s25, 0
      %p136 = por %p134, %p135
      %s137 = ssub.s32 %s19, %s26
      %p138 = scmp.eq.s32.totalorder %s137, 0
      %s140 = sadd.s32 %s139, 1
      %s141 = scalar_select %p138, %s139, %s140
      %p144 = pneg %p138
      %p145 = scmp.eq.s32.totalorder %s19, 1
      %p146 = por %p144, %p145
      %p147 = scmp.ne.s32.totalorder %s139, %s142
      %p148 = scmp.eq.s32.totalorder %s19, 0
      %p149 = por %p147, %p148
      %p150 = scmp.ne.s32.totalorder %s139, %s142
      %p151 = scmp.eq.s32.totalorder %s24, 1
      %p152 = por %p150, %p151
      %p153 = scmp.ne.s32.totalorder %s142, %s143
      %p154 = scmp.eq.s32.totalorder %s24, 0
      %p155 = por %p153, %p154
      %p156 = scmp.ne.s32.totalorder %s142, %s143
      %p157 = scmp.eq.s32.totalorder %s25, 1
      %p158 = por %p156, %p157
      %p160 = scmp.ne.s32.totalorder %s143, %s159
      %p161 = scmp.eq.s32.totalorder %s25, 0
      %p162 = por %p160, %p161
      %p163 = scmp.le.s32.totalorder 1, %s19
      %p164 = scmp.lt.s32.totalorder %s19, 3
      %p165 = pnand %p163, %p164
      %p166 = pneg %p165
      // Predicated region
      $region9: #{tpu_custom_call.1} parent=5 // pred_check
        _
      $region10: #{tpu_custom_call.1} parent=5 // pred_check_branch
        %168 = sbr.rel (%p165) target = $region12
      $region11: #{tpu_custom_call.1} parent=5 // pred_region
        %s169 = ssub.s32 %s19, 1
        // Predicated region
        $region13: #{tpu_custom_call.1} parent=11 // pred_check
          %p170 = pneg %p66
        $region14: #{tpu_custom_call.1} parent=11 // pred_check_branch
          %172 = sbr.rel (%p170) target = $region16
        $region15: #{tpu_custom_call.1} parent=11 // pred_region
          %s174 = ssub.s32 2048, 2048
          %175 = vsyncadd [#allocation7], %s174
          %s176 = sshll.u32 [#allocation6], 4
          %s177 = int_to_ptr.vmem [resolvable:$true] %s176
          %182 = dma.hbm_to_vmem [thread:$0]  %s1, 2048, %s177, [#allocation7], 128, 128, 8
        $region16: #{tpu_custom_call.1} parent=11 // pred_fallthru
          _
        // Predicated region
        $region17: #{tpu_custom_call.1} parent=11 // pred_check
          %p183 = pneg %p87
        $region18: #{tpu_custom_call.1} parent=11 // pred_check_branch
          %185 = sbr.rel (%p183) target = $region20
        $region19: #{tpu_custom_call.1} parent=11 // pred_region
          _
        $region20: #{tpu_custom_call.1} parent=11 // pred_fallthru
          _
        // Predicated region
        $region21: #{tpu_custom_call.1} parent=11 // pred_check
          %p186 = pneg %p108
        $region22: #{tpu_custom_call.1} parent=11 // pred_check_branch
          %188 = sbr.rel (%p186) target = $region24
        $region23: #{tpu_custom_call.1} parent=11 // pred_region
          _
        $region24: #{tpu_custom_call.1} parent=11 // pred_fallthru
          _
        // Predicated region
        $region25: #{tpu_custom_call.1} parent=11 // pred_check
          %p189 = pneg %p129
        $region26: #{tpu_custom_call.1} parent=11 // pred_check_branch
          %191 = sbr.rel (%p189) target = $region28
        $region27: #{tpu_custom_call.1} parent=11 // pred_region
          _
        $region28: #{tpu_custom_call.1} parent=11 // pred_fallthru
          _
      $region12: #{tpu_custom_call.1} parent=5 // pred_fallthru
        _
      %p192 = scmp.lt.s32.totalorder %s19, 2
      // Predicated region
      $region29: #{tpu_custom_call.1} parent=5 // pred_check
        %p193 = pneg %p192
      $region30: #{tpu_custom_call.1} parent=5 // pred_check_branch
        %195 = sbr.rel (%p193) target = $region32
      $region31: #{tpu_custom_call.1} parent=5 // pred_region
        // Predicated region
        $region33: #{tpu_custom_call.1} parent=31 // pred_check
          %p196 = pneg %p39
        $region34: #{tpu_custom_call.1} parent=31 // pred_check_branch
          %198 = sbr.rel (%p196) target = $region36
        $region35: #{tpu_custom_call.1} parent=31 // pred_region
          %s199 = sand.u32 %s29, 1
          %s200 = scalar_lea.sflag [#allocation4], %s199
          %s201 = sand.u32 %s29, 1
          %s202 = smul.addr %s201, 32
          %s203 = scalar_lea.vmem [#allocation3], %s202
          %s204 = smul.u32 4, %s19
          %s206 = ssub.s32 512, 512
          %207 = vsyncadd %s200, %s206
          %s208 = smul.addr %s204, 128
          %s209 = scalar_lea.hbm %s0, %s208
          %s210 = sshll.u32 %s203, 4
          %s211 = int_to_ptr.vmem [resolvable:$true] %s210
          %216 = dma.hbm_to_vmem [thread:$0]  %s209, 512, %s211, %s200, 128, 128, 8
        $region36: #{tpu_custom_call.1} parent=31 // pred_fallthru
          _
      $region32: #{tpu_custom_call.1} parent=5 // pred_fallthru
        _
      %p217 = scmp.le.s32.totalorder 1, %s19
      %p218 = scmp.lt.s32.totalorder %s19, 3
      %p219 = pnand %p217, %p218
      %p220 = pneg %p219
      // Predicated region
      $region37: #{tpu_custom_call.1} parent=5 // pred_check
        _
      $region38: #{tpu_custom_call.1} parent=5 // pred_check_branch
        %222 = sbr.rel (%p219) target = $region40
      $region39: #{tpu_custom_call.1} parent=5 // pred_region
        %s223 = ssub.s32 %s19, 1
        %s224 = sand.u32 %s32, 1
        %s225 = scalar_lea.sflag [#allocation4], %s224
        %s226 = sand.u32 %s32, 1
        %s227 = smul.addr %s226, 32
        %s228 = scalar_lea.vmem [#allocation3], %s227
        // Predicated region
        $region41: #{tpu_custom_call.1} parent=39 // pred_check
          %p229 = pneg %p45
        $region42: #{tpu_custom_call.1} parent=39 // pred_check_branch
          %231 = sbr.rel (%p229) target = $region44
        $region43: #{tpu_custom_call.1} parent=39 // pred_region
          %232 = dma.done %s225, 512
        $region44: #{tpu_custom_call.1} parent=39 // pred_fallthru
          _
        // Predicated region
        $region45: #{tpu_custom_call.1} parent=39 // pred_check
          %p233 = pneg %p66
        $region46: #{tpu_custom_call.1} parent=39 // pred_check_branch
          %235 = sbr.rel (%p233) target = $region48
        $region47: #{tpu_custom_call.1} parent=39 // pred_region
          %236 = dma.done [#allocation7], 2048
        $region48: #{tpu_custom_call.1} parent=39 // pred_fallthru
          _
        %s237 = sand.u32 %s32, 1
        %s238 = scalar_lea.sflag [#allocation4], %s237
        %s239 = sand.u32 %s32, 1
        %s240 = smul.addr %s239, 32
        %s241 = scalar_lea.vmem [#allocation3], %s240
        %p242 = pneg %p45
        %p243 = pneg %p42
        %p244 = pneg %p66
        %p245 = pneg %p63
        %p246 = pneg %p87
        %p247 = pneg %p84
        %p248 = pneg %p108
        %p249 = pneg %p105
        %p250 = pneg %p129
        %p251 = pneg %p126
        %p252 = pneg %p155
        %p253 = pneg %p152
        %s254 = sand.u32 %s142, 1
        %s255 = scalar_lea.sflag [#allocation5], %s254
        %s256 = sand.u32 %s142, 1
        %s257 = smul.addr %s256, 32
        %s258 = scalar_lea.vmem [#allocation8], %s257
        %s259 = smul.u32 4, %s24
        %s260 = smul.u32 4, %s24
        %v261 = vld [vmem:[%s228] sm:$0xff]
        %v262 = vld [vmem:[%s228 + $0x8] sm:$0xff]
        %v263 = vld [vmem:[%s228 + $0x10] sm:$0xff]
        %v264 = vld [vmem:[%s228 + $0x18] sm:$0xff]
        %v265 = vld [vmem:[#allocation6] sm:$0xff]
        %v266 = vld [vmem:[#allocation6 + $0x8] sm:$0xff]
        %v267 = vld [vmem:[#allocation6 + $0x10] sm:$0xff]
        %v268 = vld [vmem:[#allocation6 + $0x18] sm:$0xff]
        %v269 = vld [vmem:[#allocation6 + $0x20] sm:$0xff]
        %v270 = vld [vmem:[#allocation6 + $0x28] sm:$0xff]
        %v271 = vld [vmem:[#allocation6 + $0x30] sm:$0xff]
        %v272 = vld [vmem:[#allocation6 + $0x38] sm:$0xff]
        %v273 = vld [vmem:[#allocation6 + $0x40] sm:$0xff]
        %v274 = vld [vmem:[#allocation6 + $0x48] sm:$0xff]
        %v275 = vld [vmem:[#allocation6 + $0x50] sm:$0xff]
        %v276 = vld [vmem:[#allocation6 + $0x58] sm:$0xff]
        %v277 = vld [vmem:[#allocation6 + $0x60] sm:$0xff]
        %v278 = vld [vmem:[#allocation6 + $0x68] sm:$0xff]
        %v279 = vld [vmem:[#allocation6 + $0x70] sm:$0xff]
        %v280 = vld [vmem:[#allocation6 + $0x78] sm:$0xff]
        %v281 = vld [vmem:[%s2] sm:$0x1]
        %v283 = vlaneseq
        %v284 = vshrl.u32 %v283, 7
        %v285 = vsub.s32 0, %v284
        %v286 = vrot.slane %v281, %v285
        %288 = vmatprep.subr.mxu0 0.0
        %289 = vmatpush1.msra.mxu0 %v265
        %290 = vmatprep.subr.mxu0 0.0
        %291 = vmatpush1.msra.mxu0 %v266
        %292 = vmatprep.subr.mxu0 0.0
        %293 = vmatpush1.msra.mxu0 %v267
        %294 = vmatprep.subr.mxu0 0.0
        %295 = vmatpush1.msra.mxu0 %v268
        %296 = vmatprep.subr.mxu0 0.0
        %297 = vmatpush1.msra.mxu0 %v269
        %298 = vmatprep.subr.mxu0 0.0
        %299 = vmatpush1.msra.mxu0 %v270
        %300 = vmatprep.subr.mxu0 0.0
        %301 = vmatpush1.msra.mxu0 %v271
        %302 = vmatprep.subr.mxu0 0.0
        %303 = vmatpush1.msra.mxu0 %v272
        %304 = vmatprep.subr.mxu0 0.0
        %305 = vmatpush1.msra.mxu0 %v273
        %306 = vmatprep.subr.mxu0 0.0
        %307 = vmatpush1.msra.mxu0 %v274
        %308 = vmatprep.subr.mxu0 0.0
        %309 = vmatpush1.msra.mxu0 %v275
        %310 = vmatprep.subr.mxu0 0.0
        %311 = vmatpush1.msra.mxu0 %v276
        %312 = vmatprep.subr.mxu0 0.0
        %313 = vmatpush1.msra.mxu0 %v277
        %314 = vmatprep.subr.mxu0 0.0
        %315 = vmatpush1.msra.mxu0 %v278
        %316 = vmatprep.subr.mxu0 0.0
        %317 = vmatpush1.msra.mxu0 %v279
        %318 = vmatprep.subr.mxu0 0.0
        %319 = vmatpush1.msra.mxu0 %v280
        %320 = vmatprep.subr.mxu0 0.0
        %321 = vmatpush1.msra.mxu0 0.0
        %322 = vmatprep.subr.mxu0 0.0
        %323 = vmatpush1.msra.mxu0 0.0
        %324 = vmatprep.subr.mxu0 0.0
        %325 = vmatpush1.msra.mxu0 0.0
        %326 = vmatprep.subr.mxu0 0.0
        %327 = vmatpush1.msra.mxu0 0.0
        %328 = vmatprep.subr.mxu0 0.0
        %329 = vmatpush1.msra.mxu0 0.0
        %330 = vmatprep.subr.mxu0 0.0
        %331 = vmatpush1.msra.mxu0 0.0
        %332 = vmatprep.subr.mxu0 0.0
        %333 = vmatpush1.msra.mxu0 0.0
        %334 = vmatprep.subr.mxu0 0.0
        %335 = vmatpush1.msra.mxu0 0.0
        %336 = vmatprep.subr.mxu0 0.0
        %337 = vmatpush1.msra.mxu0 0.0
        %338 = vmatprep.subr.mxu0 0.0
        %339 = vmatpush1.msra.mxu0 0.0
        %340 = vmatprep.subr.mxu0 0.0
        %341 = vmatpush1.msra.mxu0 0.0
        %342 = vmatprep.subr.mxu0 0.0
        %343 = vmatpush1.msra.mxu0 0.0
        %344 = vmatprep.subr.mxu0 0.0
        %345 = vmatpush1.msra.mxu0 0.0
        %346 = vmatprep.subr.mxu0 0.0
        %347 = vmatpush1.msra.mxu0 0.0
        %348 = vmatprep.subr.mxu0 0.0
        %349 = vmatpush1.msra.mxu0 0.0
        %350 = vmatprep.subr.mxu0 0.0
        %351 = vmatpush1.msra.mxu0 0.0
        %352 = vmatprep.mubr.f32.mxu0 0.0
        %353 = vmatmul.mubr.f32.gmra.mrb[0].mxu0 %v261
        %v354 = vpop.f32.mrb[0].mxu0
        %v355 = vadd.f32 %v286, %v354
        %v356 = vpop.f32.mrb[0].mxu0
        %357 = vmatprep.mubr.f32.mxu0 0.0
        %358 = vmatmul.mubr.f32.gmra.mrb[0].mxu0 %v262
        %v359 = vpop.f32.mrb[0].mxu0
        %v360 = vadd.f32 %v286, %v359
        %v361 = vpop.f32.mrb[0].mxu0
        %362 = vmatprep.mubr.f32.mxu0 0.0
        %363 = vmatmul.mubr.f32.gmra.mrb[0].mxu0 %v263
        %v364 = vpop.f32.mrb[0].mxu0
        %v365 = vadd.f32 %v286, %v364
        %v366 = vpop.f32.mrb[0].mxu0
        %367 = vmatprep.mubr.f32.mxu0 0.0
        %368 = vmatmul.mubr.f32.gmra.mrb[0].mxu0 %v264
        %v369 = vpop.f32.mrb[0].mxu0
        %v370 = vadd.f32 %v286, %v369
        %v371 = vpop.f32.mrb[0].mxu0
        %372 = vdwg.mxu0
        %v373 = vmax.f32 %v355, 0.0
        %v374 = vmax.f32 %v360, 0.0
        %v375 = vmax.f32 %v365, 0.0
        %v376 = vmax.f32 %v370, 0.0
        %v377 = vld [vmem:[%s3] sm:$0x1]
        %v379 = vlaneseq
        %v380 = vshrl.u32 %v379, 7
        %v381 = vsub.s32 0, %v380
        %v382 = vrot.slane %v377, %v381
        %v384 = vmul.f32 %v373, %v382
        %v385 = vmul.f32 %v374, %v382
        %v386 = vmul.f32 %v375, %v382
        %v387 = vmul.f32 %v376, %v382
        %388 = vadd.xlane.f32.xlu0 %v384
        %v389 = vpop.xlane.xlu0 %388
        %390 = vadd.xlane.f32.xlu0 %v385
        %v391 = vpop.xlane.xlu0 %390
        %392 = vadd.xlane.f32.xlu0 %v386
        %v393 = vpop.xlane.xlu0 %392
        %394 = vadd.xlane.f32.xlu0 %v387
        %v395 = vpop.xlane.xlu0 %394
        %s396 = sld [smem:[#allocation2]]
        %v397 = vstv %s396
        %v398 = vadd.f32 %v389, %v397
        %v399 = vadd.f32 %v391, %v397
        %v400 = vadd.f32 %v393, %v397
        %v401 = vadd.f32 %v395, %v397
        %v402 = vlaneseq
        %v403 = vand.u32 %v402, 127
        %vm404 = vcmp.eq.s32.totalorder %v403, 96
        %v405 = vsel %vm404, %v398, %v261
        %v406 = vsel %vm404, %v399, %v262
        %v407 = vsel %vm404, %v400, %v263
        %v408 = vsel %vm404, %v401, %v264
        %409 = vst [vmem:[%s258] sm:$0xff] %v405
        %410 = vst [vmem:[%s258 + $0x8] sm:$0xff] %v406
        %411 = vst [vmem:[%s258 + $0x10] sm:$0xff] %v407
        %412 = vst [vmem:[%s258 + $0x18] sm:$0xff] %v408
        %s413 = sand.u32 %s142, 1
        %s414 = scalar_lea.sflag [#allocation5], %s413
        %s415 = sand.u32 %s142, 1
        %s416 = smul.addr %s415, 32
        %s417 = scalar_lea.vmem [#allocation8], %s416
        // Predicated region
        $region49: #{tpu_custom_call.1} parent=39 // pred_check
          %p418 = pneg %p152
        $region50: #{tpu_custom_call.1} parent=39 // pred_check_branch
          %420 = sbr.rel (%p418) target = $region52
        $region51: #{tpu_custom_call.1} parent=39 // pred_region
          %s421 = smul.u32 4, %s24
          %s423 = ssub.s32 512, 512
          %424 = vsyncadd %s414, %s423
          %s425 = smul.addr %s421, 128
          %s426 = scalar_lea.hbm %s5, %s425
          %s427 = sshll.u32 %s417, 4
          %s428 = int_to_ptr.vmem [resolvable:$true] %s427
          %433 = dma.vmem_to_hbm [thread:$0]  %s428, 512, %s426, %s414, 128, 128, 8
        $region52: #{tpu_custom_call.1} parent=39 // pred_fallthru
          _
      $region40: #{tpu_custom_call.1} parent=5 // pred_fallthru
        _
      %p434 = scmp.le.s32.totalorder 2, %s19
      // Predicated region
      $region53: #{tpu_custom_call.1} parent=5 // pred_check
        %p435 = pneg %p434
      $region54: #{tpu_custom_call.1} parent=5 // pred_check_branch
        %437 = sbr.rel (%p435) target = $region56
      $region55: #{tpu_custom_call.1} parent=5 // pred_region
        %s438 = ssub.s32 %s19, 2
        // Predicated region
        $region57: #{tpu_custom_call.1} parent=55 // pred_check
          %p439 = pneg %p158
        $region58: #{tpu_custom_call.1} parent=55 // pred_check_branch
          %441 = sbr.rel (%p439) target = $region60
        $region59: #{tpu_custom_call.1} parent=55 // pred_region
          %s442 = sand.u32 %s143, 1
          %s443 = scalar_lea.sflag [#allocation5], %s442
          %s444 = sand.u32 %s143, 1
          %s445 = smul.addr %s444, 32
          %s446 = scalar_lea.vmem [#allocation8], %s445
          %447 = dma.done %s443, 512
        $region60: #{tpu_custom_call.1} parent=55 // pred_fallthru
          _
      $region56: #{tpu_custom_call.1} parent=5 // pred_fallthru
        _
    $region6: #{tpu_custom_call.1} parent=1 // loop_footer
      %s23 = sadd.s32 1, %s19
    $region7: #{tpu_custom_call.1} parent=1 // loop_footer_branch
      %18 = sbr.rel target = $region3
    $region8: #{tpu_custom_call.1} parent=1 // loop_exit
      _
    %448 = vsyncpa [#allocation4], 1
    %s449 = scalar_lea.sflag [#allocation4], 1
    %450 = vsyncpa %s449, 1
    %451 = vsyncpa [#allocation7], 1
    %452 = vsyncpa [#allocation5], 1
    %s453 = scalar_lea.sflag [#allocation5], 1
    %454 = vsyncpa %s453, 1

</llo_original>
